<compile_context>
chip_gen: v6e
topology: v6e:2x2x1
jax: 0.10.0
libtpu: 0.0.40
codegen_flags: <defaults>
</compile_context>

<pallas_src>
from functools import partial

import jax
import jax.numpy as jnp
from jax.experimental import pallas as pl
from jax.experimental.pallas import tpu as pltpu


def _round_up(n, m):
    return ((n + m - 1) // m) * m


def _mlp_kernel(x_ref, w1_ref, b1_ref, w2_ref, b2_ref, w3_ref, b3_ref, o_ref):
    # One (TM, 256) batch tile per grid step; weights/biases stay resident in VMEM.
    cd = w1_ref.dtype                                   # matmul-operand dtype (f32 or bf16)
    x = x_ref[...].astype(cd)                           # in-VMEM cast: free (VPU slack), no extra HBM pass
    h1 = jnp.dot(x, w1_ref[...], preferred_element_type=jnp.float32) + b1_ref[...]
    h1 = jnp.maximum(h1, 0.0)                           # ReLU (f32)
    h2 = jnp.dot(h1.astype(cd), w2_ref[...],
                 preferred_element_type=jnp.float32) + b2_ref[...]
    h2 = jnp.maximum(h2, 0.0)                           # ReLU (f32)
    out = jnp.dot(h2.astype(cd), w3_ref[...],
                  preferred_element_type=jnp.float32) + b3_ref[...]
    o_ref[...] = out.astype(o_ref.dtype)                # (TM, 128) lane-dense store


def prepare_params(params, compute_dtype=jnp.float32):
    """One-time param prep (hoisted out of the per-call path).

    Zero-pads layers 2/3 to 128 lanes (mathematically inert), reshapes biases to (1, 128),
    and casts weights once to `compute_dtype` (bf16 recommended on v6e/v7x for MXU peak);
    biases stay f32 since accumulation is f32.
    """
    w1, b1, w2, b2, w3, b3 = params
    b1r = b1.reshape(1, 128).astype(jnp.float32)                         # (1, 128)
    w2p = jnp.zeros((128, 128), jnp.float32).at[:, :64].set(w2)          # (128, 128)
    b2p = jnp.zeros((1, 128), jnp.float32).at[0, :64].set(b2)            # (1, 128)
    w3p = jnp.zeros((128, 128), jnp.float32).at[:64, :10].set(w3)        # (128, 128)
    b3p = jnp.zeros((1, 128), jnp.float32).at[0, :10].set(b3)            # (1, 128)
    return (w1.astype(compute_dtype), b1r,
            w2p.astype(compute_dtype), b2p,
            w3p.astype(compute_dtype), b3p)


@partial(jax.jit, static_argnames=("tm", "out_dtype"))
def blob_model_forward(x, prepared, *, tm=4096, out_dtype=jnp.float32):
    """x: (B, C, H, W) float32 with C*H*W == 256. Returns logits (B, 10) in out_dtype.

    `prepared` comes from prepare_params(); matmul-operand dtype is taken from the
    prepared weights (f32 for exactness, bf16 for v6e/v7x performance).
    """
    w1c, b1r, w2c, b2p, w3c, b3p = prepared
    B = x.shape[0]
    x2d = x.reshape(B, -1)                              # nn.Flatten (row-major, same as torch)
    assert x2d.shape[1] == 256, "BlobModel expects 256 flattened features"

    # Batch tile: big enough to amortize ~0.35 us/step pipeline overhead, 16-aligned
    # (bf16 sublane packing), capped so the grid has >=2 steps (both v7x TCs get work)
    # and the double-buffered footprint fits scoped VMEM on all generations.
    TM = min(int(tm), _round_up(B, 16))
    if B > 16:
        TM = min(TM, _round_up(pl.cdiv(B, 2), 16))
    TM = max(16, TM)
    grid = (pl.cdiv(B, TM),)                            # ragged last block handled by Pallas

    resident = lambda shape: pl.BlockSpec(shape, lambda i: (0, 0))   # stays in VMEM across steps

    out = pl.pallas_call(
        _mlp_kernel,
        out_shape=jax.ShapeDtypeStruct((B, 128), out_dtype),
        grid=grid,
        in_specs=[
            pl.BlockSpec((TM, 256), lambda i: (i, 0)),  # streamed, double-buffered
            resident(w1c.shape), resident(b1r.shape),
            resident(w2c.shape), resident(b2p.shape),
            resident(w3c.shape), resident(b3p.shape),
        ],
        out_specs=pl.BlockSpec((TM, 128), lambda i: (i, 0)),
        compiler_params=pltpu.CompilerParams(
            dimension_semantics=("parallel",),          # batch axis -> 2 TCs on v7x
            vmem_limit_bytes=32 * 1024 * 1024,          # TM=4096 f32 ~13.5 MiB; headroom on v5e
        ),
    )(x2d, w1c, b1r, w2c, b2p, w3c, b3p)

    # Padded rows (>= B) are never written; only lane padding is sliced away here.
    return out[:, :10]


def init_params(key):
    """Deterministic init mimicking torch.nn.Linear's U(-1/sqrt(in), 1/sqrt(in)).
    Weights stored as (in_features, out_features) — transpose of torch layout."""
    dims = [(256, 128), (128, 64), (64, 10)]
    params = []
    for i, (fin, fout) in enumerate(dims):
        kw, kb = jax.random.split(jax.random.fold_in(key, i))
        bound = 1.0 / (fin ** 0.5)
        w = jax.random.uniform(kw, (fin, fout), jnp.float32, -bound, bound)
        b = jax.random.uniform(kb, (fout,), jnp.float32, -bound, bound)
        params += [w, b]
    return tuple(params)


def _reference(x, params):
    w1, b1, w2, b2, w3, b3 = params
    h = x.reshape(x.shape[0], -1)
    h = jnp.maximum(h @ w1 + b1, 0.0)
    h = jnp.maximum(h @ w2 + b2, 0.0)
    return h @ w3 + b3


if __name__ == "__main__":
    key = jax.random.PRNGKey(0)
    kx, kp = jax.random.split(key)
    # (B, C, H, W) = (2, 1, 16, 16) -> 1*16*16 = 256 flattened features.
    x = jax.random.normal(kx, (2, 1, 16, 16), jnp.float32)
    params = init_params(kp)
    ref = _reference(x, params)

    # Exact path: f32 matmul operands -> bit-level agreement with the reference.
    prepared_f32 = prepare_params(params, jnp.float32)
    logits = blob_model_forward(x, prepared_f32)
    jax.block_until_ready(logits)
    assert logits.shape == (2, 10)
    assert jnp.allclose(logits, ref, atol=1e-5, rtol=1e-5)

    # Production path (v6e/v7x): bf16 matmul operands (cast in-kernel / at prep time),
    # f32 accumulation, bf16 logits (halved output HBM write). Looser tolerance expected.
    prepared_bf16 = prepare_params(params, jnp.bfloat16)
    logits_bf16 = blob_model_forward(x, prepared_bf16, out_dtype=jnp.bfloat16)
    jax.block_until_ready(logits_bf16)
    assert logits_bf16.shape == (2, 10)
    assert jnp.allclose(logits_bf16.astype(jnp.float32), ref, atol=5e-2, rtol=5e-2)

    print("KERNEL_OK")
</pallas_src>

<mosaic_0001>
module attributes {stable_mosaic.version = 11 : i64} {
  func.func @_mlp_kernel(%arg0: i32, %arg1: memref<16x256xf32, #tpu.memory_space<vmem>>, %arg2: memref<256x128xf32, #tpu.memory_space<vmem>>, %arg3: memref<1x128xf32, #tpu.memory_space<vmem>>, %arg4: memref<128x128xf32, #tpu.memory_space<vmem>>, %arg5: memref<1x128xf32, #tpu.memory_space<vmem>>, %arg6: memref<128x128xf32, #tpu.memory_space<vmem>>, %arg7: memref<1x128xf32, #tpu.memory_space<vmem>>, %arg8: memref<16x128xf32, #tpu.memory_space<vmem>>) attributes {dimension_semantics = [#tpu.dimension_semantics<parallel>], iteration_bounds = array<i64: 1>, scalar_prefetch = 0 : i64, scratch_operands = 0 : i64, tpu.core_type = #tpu.core_type<tc>, window_params = [{transform_indices = @transform_0, window_bounds = array<i64: 16, 256>}, {pipeline_mode = #tpu.pipeline_mode<synchronous>, transform_indices = @transform_1, window_bounds = array<i64: 256, 128>}, {pipeline_mode = #tpu.pipeline_mode<synchronous>, transform_indices = @transform_2, window_bounds = array<i64: 1, 128>}, {pipeline_mode = #tpu.pipeline_mode<synchronous>, transform_indices = @transform_3, window_bounds = array<i64: 128, 128>}, {pipeline_mode = #tpu.pipeline_mode<synchronous>, transform_indices = @transform_4, window_bounds = array<i64: 1, 128>}, {pipeline_mode = #tpu.pipeline_mode<synchronous>, transform_indices = @transform_5, window_bounds = array<i64: 128, 128>}, {pipeline_mode = #tpu.pipeline_mode<synchronous>, transform_indices = @transform_6, window_bounds = array<i64: 1, 128>}, {transform_indices = @transform_7, window_bounds = array<i64: 16, 128>}]} {
    %c0 = arith.constant 0 : index
    %c0_0 = arith.constant 0 : index
    %0 = vector.load %arg1[%c0, %c0_0] : memref<16x256xf32, #tpu.memory_space<vmem>>, vector<16x256xf32>
    %c0_1 = arith.constant 0 : index
    %c0_2 = arith.constant 0 : index
    %1 = vector.load %arg2[%c0_1, %c0_2] : memref<256x128xf32, #tpu.memory_space<vmem>>, vector<256x128xf32>
    %cst = arith.constant dense<0.000000e+00> : vector<16x128xf32>
    %2 = tpu.matmul %0, %1, %cst {dimension_numbers = #tpu.dot_dimension_numbers<[1], [0], [0], [1], [0, 0, 1, 1], [], []>} : vector<16x256xf32>, vector<256x128xf32>, vector<16x128xf32> -> vector<16x128xf32>
    %c0_3 = arith.constant 0 : index
    %c0_4 = arith.constant 0 : index
    %3 = vector.load %arg3[%c0_3, %c0_4] : memref<1x128xf32, #tpu.memory_space<vmem>>, vector<1x128xf32>
    %4 = vector.broadcast %3 : vector<1x128xf32> to vector<16x128xf32>
    %5 = arith.addf %2, %4 : vector<16x128xf32>
    %cst_5 = arith.constant 0.000000e+00 : f32
    %6 = vector.broadcast %cst_5 : f32 to vector<16x128xf32>
    %7 = arith.maximumf %5, %6 : vector<16x128xf32>
    %c0_6 = arith.constant 0 : index
    %c0_7 = arith.constant 0 : index
    %8 = vector.load %arg4[%c0_6, %c0_7] : memref<128x128xf32, #tpu.memory_space<vmem>>, vector<128x128xf32>
    %cst_8 = arith.constant dense<0.000000e+00> : vector<16x128xf32>
    %9 = tpu.matmul %7, %8, %cst_8 {dimension_numbers = #tpu.dot_dimension_numbers<[1], [0], [0], [1], [0, 0, 1, 1], [], []>} : vector<16x128xf32>, vector<128x128xf32>, vector<16x128xf32> -> vector<16x128xf32>
    %c0_9 = arith.constant 0 : index
    %c0_10 = arith.constant 0 : index
    %10 = vector.load %arg5[%c0_9, %c0_10] : memref<1x128xf32, #tpu.memory_space<vmem>>, vector<1x128xf32>
    %11 = vector.broadcast %10 : vector<1x128xf32> to vector<16x128xf32>
    %12 = arith.addf %9, %11 : vector<16x128xf32>
    %cst_11 = arith.constant 0.000000e+00 : f32
    %13 = vector.broadcast %cst_11 : f32 to vector<16x128xf32>
    %14 = arith.maximumf %12, %13 : vector<16x128xf32>
    %c0_12 = arith.constant 0 : index
    %c0_13 = arith.constant 0 : index
    %15 = vector.load %arg6[%c0_12, %c0_13] : memref<128x128xf32, #tpu.memory_space<vmem>>, vector<128x128xf32>
    %cst_14 = arith.constant dense<0.000000e+00> : vector<16x128xf32>
    %16 = tpu.matmul %14, %15, %cst_14 {dimension_numbers = #tpu.dot_dimension_numbers<[1], [0], [0], [1], [0, 0, 1, 1], [], []>} : vector<16x128xf32>, vector<128x128xf32>, vector<16x128xf32> -> vector<16x128xf32>
    %c0_15 = arith.constant 0 : index
    %c0_16 = arith.constant 0 : index
    %17 = vector.load %arg7[%c0_15, %c0_16] : memref<1x128xf32, #tpu.memory_space<vmem>>, vector<1x128xf32>
    %18 = vector.broadcast %17 : vector<1x128xf32> to vector<16x128xf32>
    %19 = arith.addf %16, %18 : vector<16x128xf32>
    %c0_17 = arith.constant 0 : index
    %c0_18 = arith.constant 0 : index
    %20 = vector.load %arg8[%c0_17, %c0_18] : memref<16x128xf32, #tpu.memory_space<vmem>>, vector<16x128xf32>
    tpu.vector_store %arg8[%c0_17, %c0_18], %19 {strides = array<i32>} : memref<16x128xf32, #tpu.memory_space<vmem>>, vector<16x128xf32>,
    return
  }
  func.func @transform_0(%arg0: i32) -> (i32, i32) {
    %c0_i32 = arith.constant 0 : i32
    %c0_i32_0 = arith.constant 0 : i32
    return %arg0, %c0_i32 : i32, i32
  }
  func.func @transform_1(%arg0: i32) -> (i32, i32) {
    %c0_i32 = arith.constant 0 : i32
    %c0_i32_0 = arith.constant 0 : i32
    %c0_i32_1 = arith.constant 0 : i32
    return %c0_i32, %c0_i32_0 : i32, i32
  }
  func.func @transform_2(%arg0: i32) -> (i32, i32) {
    %c0_i32 = arith.constant 0 : i32
    %c0_i32_0 = arith.constant 0 : i32
    %c0_i32_1 = arith.constant 0 : i32
    return %c0_i32, %c0_i32_0 : i32, i32
  }
  func.func @transform_3(%arg0: i32) -> (i32, i32) {
    %c0_i32 = arith.constant 0 : i32
    %c0_i32_0 = arith.constant 0 : i32
    %c0_i32_1 = arith.constant 0 : i32
    return %c0_i32, %c0_i32_0 : i32, i32
  }
  func.func @transform_4(%arg0: i32) -> (i32, i32) {
    %c0_i32 = arith.constant 0 : i32
    %c0_i32_0 = arith.constant 0 : i32
    %c0_i32_1 = arith.constant 0 : i32
    return %c0_i32, %c0_i32_0 : i32, i32
  }
  func.func @transform_5(%arg0: i32) -> (i32, i32) {
    %c0_i32 = arith.constant 0 : i32
    %c0_i32_0 = arith.constant 0 : i32
    %c0_i32_1 = arith.constant 0 : i32
    return %c0_i32, %c0_i32_0 : i32, i32
  }
  func.func @transform_6(%arg0: i32) -> (i32, i32) {
    %c0_i32 = arith.constant 0 : i32
    %c0_i32_0 = arith.constant 0 : i32
    %c0_i32_1 = arith.constant 0 : i32
    return %c0_i32, %c0_i32_0 : i32, i32
  }
  func.func @transform_7(%arg0: i32) -> (i32, i32) {
    %c0_i32 = arith.constant 0 : i32
    %c0_i32_0 = arith.constant 0 : i32
    return %arg0, %c0_i32 : i32, i32
  }
}

</mosaic_0001>

<llo_original>
// kernel: blob_model_forward.1
$region0: #{blob_model_forward.1}
  #allocation0 [shape = 'u32[]', space=smem, size = 0x4, offset = 0x4, fixed_abs, tag = 'smem constant byte address 0x4 - core index']
  #allocation1 [shape = 'u32[144,128]{1,0:T(1,128)}', space=vmem, size = 0x12000, scoped, tag = 'internal scratch']
  %s0 = inlined_call_operand.vmem [shape: f32[2,256], index: 0, kind: input, shape index: {}]
  %s1 = inlined_call_operand.hbm [shape: f32[256,128], index: 1, kind: input, shape index: {}]
  %s2 = inlined_call_operand.vmem [shape: f32[1,128], index: 2, kind: input, shape index: {}]
  %s3 = inlined_call_operand.hbm [shape: f32[128,128], index: 3, kind: input, shape index: {}]
  %s4 = inlined_call_operand.vmem [shape: f32[1,128], index: 4, kind: input, shape index: {}]
  %s5 = inlined_call_operand.hbm [shape: f32[128,128], index: 5, kind: input, shape index: {}]
  %s6 = inlined_call_operand.vmem [shape: f32[1,128], index: 6, kind: input, shape index: {}]
  %s7 = inlined_call_operand.hbm [shape: f32[2,128], index: 7, kind: output, shape index: {}]
  %s8 = sld [smem:[#allocation0]]
  $region50: #{blob_model_forward.1} parent=0
    _
  %s10 = ssub.s32 1, %s8
  %s11 = scalar_select 0, %s10, %s8
  $region1: #{blob_model_forward.1} parent=0
    #allocation2 [shape = 'u8[131072]{0}', space=vmem, size = 0x20000, scoped, tag = 'input window, operand 1, single buffered']
    #allocation3 [shape = 's32[1]{0}', space=sflag, size = 0x4, scoped, tag = 'scoped memory for blob_model_forward.1']
    #allocation4 [shape = 's32[1]{0}', space=sflag, size = 0x4, scoped, tag = 'scoped memory for blob_model_forward.1']
    #allocation5 [shape = 'u8[65536]{0}', space=vmem, size = 0x10000, scoped, tag = 'input window, operand 3, single buffered']
    #allocation6 [shape = 's32[1]{0}', space=sflag, size = 0x4, scoped, tag = 'scoped memory for blob_model_forward.1']
    #allocation7 [shape = 'u8[65536]{0}', space=vmem, size = 0x10000, scoped, tag = 'input window, operand 5, single buffered']
    #allocation8 [shape = 'u8[8192]{0}', space=vmem, size = 0x2000, scoped, tag = 'output window, operand 0, single buffered']
    %12 = vsyncpa [#allocation3], 0
    %13 = vsyncpa [#allocation6], 0
    %14 = vsyncpa [#allocation4], 0
    // Predicated region
    $region2: #{blob_model_forward.1} parent=1 // pred_check
      _
    $region3: #{blob_model_forward.1} parent=1 // pred_check_branch
      %16 = sbr.rel (0) target = $region5
    $region4: #{blob_model_forward.1} parent=1 // pred_region
      _
    $region5: #{blob_model_forward.1} parent=1 // pred_fallthru
      _
    // Predicated region
    $region6: #{blob_model_forward.1} parent=1 // pred_check
      _
    $region7: #{blob_model_forward.1} parent=1 // pred_check_branch
      %18 = sbr.rel (0) target = $region9
    $region8: #{blob_model_forward.1} parent=1 // pred_region
      %s20 = ssub.s32 4096, 4096
      %21 = vsyncadd [#allocation3], %s20
      %s22 = sshll.u32 [#allocation2], 4
      %s23 = int_to_ptr.vmem [resolvable:$true] %s22
      %28 = dma.hbm_to_vmem [thread:$0]  %s1, 4096, %s23, [#allocation3], 128, 128, 8
    $region9: #{blob_model_forward.1} parent=1 // pred_fallthru
      _
    // Predicated region
    $region10: #{blob_model_forward.1} parent=1 // pred_check
      _
    $region11: #{blob_model_forward.1} parent=1 // pred_check_branch
      %30 = sbr.rel (0) target = $region13
    $region12: #{blob_model_forward.1} parent=1 // pred_region
      _
    $region13: #{blob_model_forward.1} parent=1 // pred_fallthru
      _
    // Predicated region
    $region14: #{blob_model_forward.1} parent=1 // pred_check
      _
    $region15: #{blob_model_forward.1} parent=1 // pred_check_branch
      %32 = sbr.rel (0) target = $region17
    $region16: #{blob_model_forward.1} parent=1 // pred_region
      %s34 = ssub.s32 2048, 2048
      %35 = vsyncadd [#allocation6], %s34
      %s36 = sshll.u32 [#allocation5], 4
      %s37 = int_to_ptr.vmem [resolvable:$true] %s36
      %42 = dma.hbm_to_vmem [thread:$0]  %s3, 2048, %s37, [#allocation6], 128, 128, 8
    $region17: #{blob_model_forward.1} parent=1 // pred_fallthru
      _
    // Predicated region
    $region18: #{blob_model_forward.1} parent=1 // pred_check
      _
    $region19: #{blob_model_forward.1} parent=1 // pred_check_branch
      %44 = sbr.rel (0) target = $region21
    $region20: #{blob_model_forward.1} parent=1 // pred_region
      _
    $region21: #{blob_model_forward.1} parent=1 // pred_fallthru
      _
    // Predicated region
    $region22: #{blob_model_forward.1} parent=1 // pred_check
      _
    $region23: #{blob_model_forward.1} parent=1 // pred_check_branch
      %46 = sbr.rel (0) target = $region25
    $region24: #{blob_model_forward.1} parent=1 // pred_region
      %s48 = ssub.s32 2048, 2048
      %49 = vsyncadd [#allocation6], %s48
      %s50 = sshll.u32 [#allocation7], 4
      %s51 = int_to_ptr.vmem [resolvable:$true] %s50
      %56 = dma.hbm_to_vmem [thread:$0]  %s5, 2048, %s51, [#allocation6], 128, 128, 8
    $region25: #{blob_model_forward.1} parent=1 // pred_fallthru
      _
    // Predicated region
    $region26: #{blob_model_forward.1} parent=1 // pred_check
      _
    $region27: #{blob_model_forward.1} parent=1 // pred_check_branch
      %58 = sbr.rel (0) target = $region29
    $region28: #{blob_model_forward.1} parent=1 // pred_region
      _
    $region29: #{blob_model_forward.1} parent=1 // pred_fallthru
      _
    // Predicated region
    $region30: #{blob_model_forward.1} parent=1 // pred_check
      _
    $region31: #{blob_model_forward.1} parent=1 // pred_check_branch
      %60 = sbr.rel (0) target = $region33
    $region32: #{blob_model_forward.1} parent=1 // pred_region
      %61 = dma.done [#allocation3], 4096
    $region33: #{blob_model_forward.1} parent=1 // pred_fallthru
      _
    // Predicated region
    $region34: #{blob_model_forward.1} parent=1 // pred_check
      _
    $region35: #{blob_model_forward.1} parent=1 // pred_check_branch
      %63 = sbr.rel (0) target = $region37
    $region36: #{blob_model_forward.1} parent=1 // pred_region
      %64 = dma.done [#allocation6], 2048
    $region37: #{blob_model_forward.1} parent=1 // pred_fallthru
      _
    // Predicated region
    $region38: #{blob_model_forward.1} parent=1 // pred_check
      _
    $region39: #{blob_model_forward.1} parent=1 // pred_check_branch
      %66 = sbr.rel (0) target = $region41
    $region40: #{blob_model_forward.1} parent=1 // pred_region
      %67 = dma.done [#allocation6], 2048
    $region41: #{blob_model_forward.1} parent=1 // pred_fallthru
      _
    %v68 = vld [vmem:[%s0] sm:$0xf]
    %v69 = vld [vmem:[%s0 + $0x4] sm:$0xf]
    %v70 = vld [vmem:[%s0 + $0x8] sm:$0xf]
    %v71 = vld [vmem:[%s0 + $0xc] sm:$0xf]
    %v72 = vld [vmem:[%s0 + $0x10] sm:$0xf]
    %v73 = vld [vmem:[%s0 + $0x14] sm:$0xf]
    %v74 = vld [vmem:[%s0 + $0x18] sm:$0xf]
    %v75 = vld [vmem:[%s0 + $0x1c] sm:$0xf]
    %v76 = vld [vmem:[#allocation2] sm:$0xff]
    %v77 = vld [vmem:[#allocation2 + $0x8] sm:$0xff]
    %v78 = vld [vmem:[#allocation2 + $0x10] sm:$0xff]
    %v79 = vld [vmem:[#allocation2 + $0x18] sm:$0xff]
    %v80 = vld [vmem:[#allocation2 + $0x20] sm:$0xff]
    %v81 = vld [vmem:[#allocation2 + $0x28] sm:$0xff]
    %v82 = vld [vmem:[#allocation2 + $0x30] sm:$0xff]
    %v83 = vld [vmem:[#allocation2 + $0x38] sm:$0xff]
    %v84 = vld [vmem:[#allocation2 + $0x40] sm:$0xff]
    %v85 = vld [vmem:[#allocation2 + $0x48] sm:$0xff]
    %v86 = vld [vmem:[#allocation2 + $0x50] sm:$0xff]
    %v87 = vld [vmem:[#allocation2 + $0x58] sm:$0xff]
    %v88 = vld [vmem:[#allocation2 + $0x60] sm:$0xff]
    %v89 = vld [vmem:[#allocation2 + $0x68] sm:$0xff]
    %v90 = vld [vmem:[#allocation2 + $0x70] sm:$0xff]
    %v91 = vld [vmem:[#allocation2 + $0x78] sm:$0xff]
    %v92 = vld [vmem:[#allocation2 + $0x80] sm:$0xff]
    %v93 = vld [vmem:[#allocation2 + $0x88] sm:$0xff]
    %v94 = vld [vmem:[#allocation2 + $0x90] sm:$0xff]
    %v95 = vld [vmem:[#allocation2 + $0x98] sm:$0xff]
    %v96 = vld [vmem:[#allocation2 + $0xa0] sm:$0xff]
    %v97 = vld [vmem:[#allocation2 + $0xa8] sm:$0xff]
    %v98 = vld [vmem:[#allocation2 + $0xb0] sm:$0xff]
    %v99 = vld [vmem:[#allocation2 + $0xb8] sm:$0xff]
    %v100 = vld [vmem:[#allocation2 + $0xc0] sm:$0xff]
    %v101 = vld [vmem:[#allocation2 + $0xc8] sm:$0xff]
    %v102 = vld [vmem:[#allocation2 + $0xd0] sm:$0xff]
    %v103 = vld [vmem:[#allocation2 + $0xd8] sm:$0xff]
    %v104 = vld [vmem:[#allocation2 + $0xe0] sm:$0xff]
    %v105 = vld [vmem:[#allocation2 + $0xe8] sm:$0xff]
    %v106 = vld [vmem:[#allocation2 + $0xf0] sm:$0xff]
    %v107 = vld [vmem:[#allocation2 + $0xf8] sm:$0xff]
    %v108 = vld [vmem:[%s2] sm:$0x1]
    %v110 = vlaneseq
    %v111 = vshrl.u32 %v110, 7
    %v112 = vsub.s32 0, %v111
    %v113 = vrot.slane %v108, %v112
    %v123 = vcombine.low %v68, %v69
    %v124 = vcombine.low %v70, %v71
    %v126 = vunpack.c.l.s4 1983009808
    %v127 = vunpack.c.0.s8 %v126
    %v128 = vlaneseq
    %v129 = vshrl.u32 %v128, 7
    %v130 = vsub.s32 %v127, %v129
    %v131 = vrot.slane %v123, %v130
    %v133 = vunpack.c.l.s4 1983009808
    %v134 = vunpack.c.0.s8 %v133
    %v135 = vlaneseq
    %v136 = vshrl.u32 %v135, 7
    %v137 = vsub.s32 %v134, %v136
    %v138 = vrot.slane %v124, %v137
    %v139 = vcombine.low %v131, %v138
    %v140 = vcombine.high %v131, %v138
    %v141 = vcombine.low %v72, %v73
    %v142 = vcombine.low %v74, %v75
    %v144 = vunpack.c.l.s4 1983009808
    %v145 = vunpack.c.0.s8 %v144
    %v146 = vlaneseq
    %v147 = vshrl.u32 %v146, 7
    %v148 = vsub.s32 %v145, %v147
    %v149 = vrot.slane %v141, %v148
    %v151 = vunpack.c.l.s4 1983009808
    %v152 = vunpack.c.0.s8 %v151
    %v153 = vlaneseq
    %v154 = vshrl.u32 %v153, 7
    %v155 = vsub.s32 %v152, %v154
    %v156 = vrot.slane %v142, %v155
    %v157 = vcombine.low %v149, %v156
    %v158 = vcombine.high %v149, %v156
    %163 = vmatprep.subr.mxu0 0.0
    %164 = vmatpush1.msra.mxu0 %v91
    %165 = vmatprep.subr.mxu0 0.0
    %166 = vmatpush1.msra.mxu0 %v90
    %167 = vmatprep.subr.mxu0 0.0
    %168 = vmatpush1.msra.mxu0 %v89
    %169 = vmatprep.subr.mxu0 0.0
    %170 = vmatpush1.msra.mxu0 %v88
    %171 = vmatprep.subr.mxu0 0.0
    %172 = vmatpush1.msra.mxu0 %v87
    %173 = vmatprep.subr.mxu0 0.0
    %174 = vmatpush1.msra.mxu0 %v86
    %175 = vmatprep.subr.mxu0 0.0
    %176 = vmatpush1.msra.mxu0 %v85
    %177 = vmatprep.subr.mxu0 0.0
    %178 = vmatpush1.msra.mxu0 %v84
    %179 = vmatprep.subr.mxu0 0.0
    %180 = vmatpush1.msra.mxu0 %v83
    %181 = vmatprep.subr.mxu0 0.0
    %182 = vmatpush1.msra.mxu0 %v82
    %183 = vmatprep.subr.mxu0 0.0
    %184 = vmatpush1.msra.mxu0 %v81
    %185 = vmatprep.subr.mxu0 0.0
    %186 = vmatpush1.msra.mxu0 %v80
    %187 = vmatprep.subr.mxu0 0.0
    %188 = vmatpush1.msra.mxu0 %v79
    %189 = vmatprep.subr.mxu0 0.0
    %190 = vmatpush1.msra.mxu0 %v78
    %191 = vmatprep.subr.mxu0 0.0
    %192 = vmatpush1.msra.mxu0 %v77
    %193 = vmatprep.subr.mxu0 0.0
    %194 = vmatpush1.msra.mxu0 %v76
    %195 = vmatprep.subr.mxu0 0.0
    %196 = vmatpush2.msra.mxu0 %v107
    %197 = vmatprep.subr.mxu0 0.0
    %198 = vmatpush2.msra.mxu0 %v106
    %199 = vmatprep.subr.mxu0 0.0
    %200 = vmatpush2.msra.mxu0 %v105
    %201 = vmatprep.subr.mxu0 0.0
    %202 = vmatpush2.msra.mxu0 %v104
    %203 = vmatprep.subr.mxu0 0.0
    %204 = vmatpush2.msra.mxu0 %v103
    %205 = vmatprep.subr.mxu0 0.0
    %206 = vmatpush2.msra.mxu0 %v102
    %207 = vmatprep.subr.mxu0 0.0
    %208 = vmatpush2.msra.mxu0 %v101
    %209 = vmatprep.subr.mxu0 0.0
    %210 = vmatpush2.msra.mxu0 %v100
    %211 = vmatprep.subr.mxu0 0.0
    %212 = vmatpush2.msra.mxu0 %v99
    %213 = vmatprep.subr.mxu0 0.0
    %214 = vmatpush2.msra.mxu0 %v98
    %215 = vmatprep.subr.mxu0 0.0
    %216 = vmatpush2.msra.mxu0 %v97
    %217 = vmatprep.subr.mxu0 0.0
    %218 = vmatpush2.msra.mxu0 %v96
    %219 = vmatprep.subr.mxu0 0.0
    %220 = vmatpush2.msra.mxu0 %v95
    %221 = vmatprep.subr.mxu0 0.0
    %222 = vmatpush2.msra.mxu0 %v94
    %223 = vmatprep.subr.mxu0 0.0
    %224 = vmatpush2.msra.mxu0 %v93
    %225 = vmatprep.subr.mxu0 0.0
    %226 = vmatpush2.msra.mxu0 %v92
    %227 = vmatprep.mubr.f32.mxu0 %v140
    %228 = vmatmul.mubr.f32.gmra.mxu0 %v139
    %v229 = vpop.f32.mrf.mxu0
    %v230 = vadd.f32 %v113, %v229
    %v231 = vpop.f32.mrf.mxu0
    %232 = vmatprep.mubr.f32.mxu0 %v158
    %233 = vmatmul.mubr.f32.gmra.mxu0 %v157
    %v234 = vpop.f32.mrf.mxu0
    %v235 = vadd.f32 %v113, %v234
    %v236 = vpop.f32.mrf.mxu0
    %237 = vdwg.mxu0
    %v238 = vmax.f32 %v230, 0.0
    %v239 = vmax.f32 %v235, 0.0
    %v240 = vld [vmem:[#allocation5] sm:$0xff]
    %v241 = vld [vmem:[#allocation5 + $0x8] sm:$0xff]
    %v242 = vld [vmem:[#allocation5 + $0x10] sm:$0xff]
    %v243 = vld [vmem:[#allocation5 + $0x18] sm:$0xff]
    %v244 = vld [vmem:[#allocation5 + $0x20] sm:$0xff]
    %v245 = vld [vmem:[#allocation5 + $0x28] sm:$0xff]
    %v246 = vld [vmem:[#allocation5 + $0x30] sm:$0xff]
    %v247 = vld [vmem:[#allocation5 + $0x38] sm:$0xff]
    %v248 = vld [vmem:[#allocation5 + $0x40] sm:$0xff]
    %v249 = vld [vmem:[#allocation5 + $0x48] sm:$0xff]
    %v250 = vld [vmem:[#allocation5 + $0x50] sm:$0xff]
    %v251 = vld [vmem:[#allocation5 + $0x58] sm:$0xff]
    %v252 = vld [vmem:[#allocation5 + $0x60] sm:$0xff]
    %v253 = vld [vmem:[#allocation5 + $0x68] sm:$0xff]
    %v254 = vld [vmem:[#allocation5 + $0x70] sm:$0xff]
    %v255 = vld [vmem:[#allocation5 + $0x78] sm:$0xff]
    %v256 = vld [vmem:[%s4] sm:$0x1]
    %v258 = vlaneseq
    %v259 = vshrl.u32 %v258, 7
    %v260 = vsub.s32 0, %v259
    %v261 = vrot.slane %v256, %v260
    %263 = vmatprep.subr.mxu0 0.0
    %264 = vmatpush1.msra.mxu0 %v255
    %265 = vmatprep.subr.mxu0 0.0
    %266 = vmatpush1.msra.mxu0 %v254
    %267 = vmatprep.subr.mxu0 0.0
    %268 = vmatpush1.msra.mxu0 %v253
    %269 = vmatprep.subr.mxu0 0.0
    %270 = vmatpush1.msra.mxu0 %v252
    %271 = vmatprep.subr.mxu0 0.0
    %272 = vmatpush1.msra.mxu0 %v251
    %273 = vmatprep.subr.mxu0 0.0
    %274 = vmatpush1.msra.mxu0 %v250
    %275 = vmatprep.subr.mxu0 0.0
    %276 = vmatpush1.msra.mxu0 %v249
    %277 = vmatprep.subr.mxu0 0.0
    %278 = vmatpush1.msra.mxu0 %v248
    %279 = vmatprep.subr.mxu0 0.0
    %280 = vmatpush1.msra.mxu0 %v247
    %281 = vmatprep.subr.mxu0 0.0
    %282 = vmatpush1.msra.mxu0 %v246
    %283 = vmatprep.subr.mxu0 0.0
    %284 = vmatpush1.msra.mxu0 %v245
    %285 = vmatprep.subr.mxu0 0.0
    %286 = vmatpush1.msra.mxu0 %v244
    %287 = vmatprep.subr.mxu0 0.0
    %288 = vmatpush1.msra.mxu0 %v243
    %289 = vmatprep.subr.mxu0 0.0
    %290 = vmatpush1.msra.mxu0 %v242
    %291 = vmatprep.subr.mxu0 0.0
    %292 = vmatpush1.msra.mxu0 %v241
    %293 = vmatprep.subr.mxu0 0.0
    %294 = vmatpush1.msra.mxu0 %v240
    %295 = vmatprep.subr.mxu0 0.0
    %296 = vmatpush2.msra.mxu0 0.0
    %297 = vmatprep.subr.mxu0 0.0
    %298 = vmatpush2.msra.mxu0 0.0
    %299 = vmatprep.subr.mxu0 0.0
    %300 = vmatpush2.msra.mxu0 0.0
    %301 = vmatprep.subr.mxu0 0.0
    %302 = vmatpush2.msra.mxu0 0.0
    %303 = vmatprep.subr.mxu0 0.0
    %304 = vmatpush2.msra.mxu0 0.0
    %305 = vmatprep.subr.mxu0 0.0
    %306 = vmatpush2.msra.mxu0 0.0
    %307 = vmatprep.subr.mxu0 0.0
    %308 = vmatpush2.msra.mxu0 0.0
    %309 = vmatprep.subr.mxu0 0.0
    %310 = vmatpush2.msra.mxu0 0.0
    %311 = vmatprep.subr.mxu0 0.0
    %312 = vmatpush2.msra.mxu0 0.0
    %313 = vmatprep.subr.mxu0 0.0
    %314 = vmatpush2.msra.mxu0 0.0
    %315 = vmatprep.subr.mxu0 0.0
    %316 = vmatpush2.msra.mxu0 0.0
    %317 = vmatprep.subr.mxu0 0.0
    %318 = vmatpush2.msra.mxu0 0.0
    %319 = vmatprep.subr.mxu0 0.0
    %320 = vmatpush2.msra.mxu0 0.0
    %321 = vmatprep.subr.mxu0 0.0
    %322 = vmatpush2.msra.mxu0 0.0
    %323 = vmatprep.subr.mxu0 0.0
    %324 = vmatpush2.msra.mxu0 0.0
    %325 = vmatprep.subr.mxu0 0.0
    %326 = vmatpush2.msra.mxu0 0.0
    %327 = vmatprep.mubr.f32.mxu0 0.0
    %328 = vmatmul.mubr.f32.gmra.mxu0 %v238
    %v329 = vpop.f32.mrf.mxu0
    %v330 = vadd.f32 %v261, %v329
    %v331 = vpop.f32.mrf.mxu0
    %332 = vmatprep.mubr.f32.mxu0 0.0
    %333 = vmatmul.mubr.f32.gmra.mxu0 %v239
    %v334 = vpop.f32.mrf.mxu0
    %v335 = vadd.f32 %v261, %v334
    %v336 = vpop.f32.mrf.mxu0
    %337 = vdwg.mxu0
    %v338 = vmax.f32 %v330, 0.0
    %v339 = vmax.f32 %v335, 0.0
    %v340 = vld [vmem:[#allocation7] sm:$0xff]
    %v341 = vld [vmem:[#allocation7 + $0x8] sm:$0xff]
    %v342 = vld [vmem:[#allocation7 + $0x10] sm:$0xff]
    %v343 = vld [vmem:[#allocation7 + $0x18] sm:$0xff]
    %v344 = vld [vmem:[#allocation7 + $0x20] sm:$0xff]
    %v345 = vld [vmem:[#allocation7 + $0x28] sm:$0xff]
    %v346 = vld [vmem:[#allocation7 + $0x30] sm:$0xff]
    %v347 = vld [vmem:[#allocation7 + $0x38] sm:$0xff]
    %v348 = vld [vmem:[#allocation7 + $0x40] sm:$0xff]
    %v349 = vld [vmem:[#allocation7 + $0x48] sm:$0xff]
    %v350 = vld [vmem:[#allocation7 + $0x50] sm:$0xff]
    %v351 = vld [vmem:[#allocation7 + $0x58] sm:$0xff]
    %v352 = vld [vmem:[#allocation7 + $0x60] sm:$0xff]
    %v353 = vld [vmem:[#allocation7 + $0x68] sm:$0xff]
    %v354 = vld [vmem:[#allocation7 + $0x70] sm:$0xff]
    %v355 = vld [vmem:[#allocation7 + $0x78] sm:$0xff]
    %v356 = vld [vmem:[%s6] sm:$0x1]
    %v358 = vlaneseq
    %v359 = vshrl.u32 %v358, 7
    %v360 = vsub.s32 0, %v359
    %v361 = vrot.slane %v356, %v360
    %363 = vmatprep.subr.mxu0 0.0
    %364 = vmatpush1.msra.mxu0 %v355
    %365 = vmatprep.subr.mxu0 0.0
    %366 = vmatpush1.msra.mxu0 %v354
    %367 = vmatprep.subr.mxu0 0.0
    %368 = vmatpush1.msra.mxu0 %v353
    %369 = vmatprep.subr.mxu0 0.0
    %370 = vmatpush1.msra.mxu0 %v352
    %371 = vmatprep.subr.mxu0 0.0
    %372 = vmatpush1.msra.mxu0 %v351
    %373 = vmatprep.subr.mxu0 0.0
    %374 = vmatpush1.msra.mxu0 %v350
    %375 = vmatprep.subr.mxu0 0.0
    %376 = vmatpush1.msra.mxu0 %v349
    %377 = vmatprep.subr.mxu0 0.0
    %378 = vmatpush1.msra.mxu0 %v348
    %379 = vmatprep.subr.mxu0 0.0
    %380 = vmatpush1.msra.mxu0 %v347
    %381 = vmatprep.subr.mxu0 0.0
    %382 = vmatpush1.msra.mxu0 %v346
    %383 = vmatprep.subr.mxu0 0.0
    %384 = vmatpush1.msra.mxu0 %v345
    %385 = vmatprep.subr.mxu0 0.0
    %386 = vmatpush1.msra.mxu0 %v344
    %387 = vmatprep.subr.mxu0 0.0
    %388 = vmatpush1.msra.mxu0 %v343
    %389 = vmatprep.subr.mxu0 0.0
    %390 = vmatpush1.msra.mxu0 %v342
    %391 = vmatprep.subr.mxu0 0.0
    %392 = vmatpush1.msra.mxu0 %v341
    %393 = vmatprep.subr.mxu0 0.0
    %394 = vmatpush1.msra.mxu0 %v340
    %395 = vmatprep.subr.mxu0 0.0
    %396 = vmatpush2.msra.mxu0 0.0
    %397 = vmatprep.subr.mxu0 0.0
    %398 = vmatpush2.msra.mxu0 0.0
    %399 = vmatprep.subr.mxu0 0.0
    %400 = vmatpush2.msra.mxu0 0.0
    %401 = vmatprep.subr.mxu0 0.0
    %402 = vmatpush2.msra.mxu0 0.0
    %403 = vmatprep.subr.mxu0 0.0
    %404 = vmatpush2.msra.mxu0 0.0
    %405 = vmatprep.subr.mxu0 0.0
    %406 = vmatpush2.msra.mxu0 0.0
    %407 = vmatprep.subr.mxu0 0.0
    %408 = vmatpush2.msra.mxu0 0.0
    %409 = vmatprep.subr.mxu0 0.0
    %410 = vmatpush2.msra.mxu0 0.0
    %411 = vmatprep.subr.mxu0 0.0
    %412 = vmatpush2.msra.mxu0 0.0
    %413 = vmatprep.subr.mxu0 0.0
    %414 = vmatpush2.msra.mxu0 0.0
    %415 = vmatprep.subr.mxu0 0.0
    %416 = vmatpush2.msra.mxu0 0.0
    %417 = vmatprep.subr.mxu0 0.0
    %418 = vmatpush2.msra.mxu0 0.0
    %419 = vmatprep.subr.mxu0 0.0
    %420 = vmatpush2.msra.mxu0 0.0
    %421 = vmatprep.subr.mxu0 0.0
    %422 = vmatpush2.msra.mxu0 0.0
    %423 = vmatprep.subr.mxu0 0.0
    %424 = vmatpush2.msra.mxu0 0.0
    %425 = vmatprep.subr.mxu0 0.0
    %426 = vmatpush2.msra.mxu0 0.0
    %427 = vmatprep.mubr.f32.mxu0 0.0
    %428 = vmatmul.mubr.f32.gmra.mxu0 %v338
    %v429 = vpop.f32.mrf.mxu0
    %v430 = vadd.f32 %v361, %v429
    %v431 = vpop.f32.mrf.mxu0
    %432 = vmatprep.mubr.f32.mxu0 0.0
    %433 = vmatmul.mubr.f32.gmra.mxu0 %v339
    %v434 = vpop.f32.mrf.mxu0
    %v435 = vadd.f32 %v361, %v434
    %v436 = vpop.f32.mrf.mxu0
    %437 = vdwg.mxu0
    %438 = vst [vmem:[#allocation8] sm:$0xff] %v430
    %439 = vst [vmem:[#allocation8 + $0x8] sm:$0xff] %v435
    // Predicated region
    $region42: #{blob_model_forward.1} parent=1 // pred_check
      _
    $region43: #{blob_model_forward.1} parent=1 // pred_check_branch
      %441 = sbr.rel (0) target = $region45
    $region44: #{blob_model_forward.1} parent=1 // pred_region
      %s443 = ssub.s32 256, 32
      %444 = vsyncadd [#allocation4], %s443
      %s445 = sshll.u32 [#allocation8], 4
      %s446 = int_to_ptr.vmem [resolvable:$true] %s445
      %451 = dma.vmem_to_hbm [thread:$0]  %s446, 32, %s7, [#allocation4], 32, 32, 2
    $region45: #{blob_model_forward.1} parent=1 // pred_fallthru
      _
    // Predicated region
    $region46: #{blob_model_forward.1} parent=1 // pred_check
      _
    $region47: #{blob_model_forward.1} parent=1 // pred_check_branch
      %453 = sbr.rel (0) target = $region49
    $region48: #{blob_model_forward.1} parent=1 // pred_region
      %454 = dma.done [#allocation4], 256
    $region49: #{blob_model_forward.1} parent=1 // pred_fallthru
      _
    %455 = vsyncpa [#allocation3], 1
    %456 = vsyncpa [#allocation6], 1
    %457 = vsyncpa [#allocation4], 1

</llo_original>
